<compile_context>
chip_gen: v6e
topology: v6e:2x2x1
jax: 0.10.0
libtpu: 0.0.40
codegen_flags: <defaults>
</compile_context>

<pallas_src>
import jax
import jax.numpy as jnp
from jax.experimental import pallas as pl
from jax.experimental.pallas import tpu as pltpu

LP_DTYPE = jnp.float8_e4m3fn      # lp_dtype of DequantOutput
HP_DTYPE = jnp.bfloat16           # hp_dtype (output dtype)
FP8_E4M3_MAX = 448.0              # saturation bound of float8_e4m3fn

_LANE = 128
_SUBLANE_FP8 = 32                 # fp8 packs 4/sublane -> (32, 128) tiles
# Double-buffered (in + out) VMEM footprint target for one pipelined block.
# 24 MiB fits v6e/v7x's 32 MiB scoped default and leaves headroom; v5e's
# 16 MiB default is raised explicitly via vmem_limit_bytes below.
_VMEM_BUDGET_BYTES = 24 << 20
_VMEM_LIMIT_BYTES = 32 << 20


def _dequant_kernel(scale_ref, x_ref, o_ref):
    """out = cast(x_fp8 -> f32) * scale, stored as hp_dtype."""
    scale = scale_ref[0]                                   # per-tensor scale (SMEM)
    o_ref[...] = (x_ref[...].astype(jnp.float32) * scale).astype(o_ref.dtype)


def _pick_lane_width(n):
    """Largest lane-dense width (multiple of 128) that divides n exactly."""
    for w in (1024, 512, 256, _LANE):
        if n % w == 0:
            return w
    return None


def _xla_dequant(x_fp8, scale_f32, hp_dtype):
    return (x_fp8.astype(jnp.float32) * scale_f32).astype(hp_dtype)


def dequant_output(x_fp8, scale, hp_dtype=HP_DTYPE):
    """Dequantize an fp8(e4m3) tensor with a per-tensor CONST scale.

    Matches DequantOutput.forward: out = cast_from_fp8(x, scale, hp_dtype).
    """
    scale_arr = jnp.asarray(scale, jnp.float32).reshape(-1)
    if scale_arr.shape != (1,):
        raise ValueError(
            "dequant_output only supports per-tensor (CONST) scalar scales; "
            f"got scale shape {jnp.asarray(scale).shape}")

    orig_shape = x_fp8.shape
    flat = x_fp8.reshape(-1)
    n = flat.shape[0]

    # 128-aligned prefix goes through the Pallas kernel; any ragged tail
    # (< 128 elements, rare) is handled with plain XLA ops instead of padding
    # and re-reading the whole input.
    n_main = (n // _LANE) * _LANE
    if n_main == 0:
        return _xla_dequant(flat, scale_arr[0], hp_dtype).reshape(orig_shape)

    main = flat[:n_main]
    w = _pick_lane_width(n_main)                 # guaranteed >= 128 here
    slab = main.reshape(-1, w)                   # free row-major reshape
    rows = slab.shape[0]

    # Block sizing from the VMEM budget: 1 byte/elem in + itemsize bytes/elem
    # out, double buffered.
    out_itemsize = jnp.dtype(hp_dtype).itemsize
    block_elems = _VMEM_BUDGET_BYTES // (2 * (1 + out_itemsize))
    block_rows = max(_SUBLANE_FP8,
                     (block_elems // w) // _SUBLANE_FP8 * _SUBLANE_FP8)

    if block_rows >= rows:
        block_rows = rows                        # single full-extent block
        steps = 1
    else:
        steps = pl.cdiv(rows, block_rows)
        # v7x megacore balance: prefer an even number of grid steps so the
        # "parallel" axis splits evenly across the two TensorCores.
        if steps % 2 == 1:
            cand = pl.cdiv(pl.cdiv(rows, steps + 1), _SUBLANE_FP8) * _SUBLANE_FP8
            cand = max(_SUBLANE_FP8, cand)
            if cand < rows and pl.cdiv(rows, cand) % 2 == 0:
                block_rows = cand
                steps = pl.cdiv(rows, cand)

    out_main = pl.pallas_call(
        _dequant_kernel,
        out_shape=jax.ShapeDtypeStruct((rows, w), hp_dtype),
        grid_spec=pltpu.PrefetchScalarGridSpec(
            num_scalar_prefetch=1,               # scale -> SMEM, loaded once
            grid=(steps,),
            in_specs=[pl.BlockSpec((block_rows, w), lambda i, s: (i, 0))],
            out_specs=pl.BlockSpec((block_rows, w), lambda i, s: (i, 0)),
        ),
        compiler_params=pltpu.CompilerParams(
            dimension_semantics=("parallel",),   # megacore sharding on v7x
            vmem_limit_bytes=_VMEM_LIMIT_BYTES,  # covers v5e's 16 MiB default
        ),
    )(scale_arr, slab)

    out_main = out_main.reshape(-1)
    if n_main != n:
        tail = _xla_dequant(flat[n_main:], scale_arr[0], hp_dtype)
        out = jnp.concatenate([out_main, tail])
    else:
        out = out_main
    return out.reshape(orig_shape)


def dequant_output_ref(x_fp8, scale, hp_dtype=HP_DTYPE):
    """Pure-JAX reference of the same forward semantics."""
    return (x_fp8.astype(jnp.float32)
            * jnp.asarray(scale, jnp.float32)).astype(hp_dtype)


if __name__ == "__main__":
    key = jax.random.PRNGKey(0)
    # NCHW activation: batch=2, channels=4, 16x16 spatial.
    shape = (2, 4, 16, 16)
    x_hp = jax.random.normal(key, shape, dtype=jnp.float32) * 3.0

    # Parameter-setup glue: CONST per-tensor scale and the fp8 tensor this
    # module receives as input.
    scale = jnp.max(jnp.abs(x_hp)) / FP8_E4M3_MAX
    x_fp8 = jnp.clip(x_hp / scale, -FP8_E4M3_MAX, FP8_E4M3_MAX).astype(LP_DTYPE)

    out = dequant_output(x_fp8, scale, HP_DTYPE)
    jax.block_until_ready(out)

    ref = dequant_output_ref(x_fp8, scale, HP_DTYPE)
    assert out.shape == shape and out.dtype == HP_DTYPE
    assert jnp.allclose(out.astype(jnp.float32), ref.astype(jnp.float32),
                        atol=1e-2 * float(scale), rtol=1e-2), "mismatch vs reference"

    print("KERNEL_OK")
</pallas_src>

<mosaic_0001>
module attributes {stable_mosaic.version = 11 : i64} {
  func.func @_dequant_kernel(%arg0: i32, %arg1: memref<1xf32, #tpu.memory_space<smem>>, %arg2: memref<2x1024xf8E4M3FN, #tpu.memory_space<vmem>>, %arg3: memref<2x1024xbf16, #tpu.memory_space<vmem>>) attributes {dimension_semantics = [#tpu.dimension_semantics<parallel>], iteration_bounds = array<i64: 1>, scalar_prefetch = 1 : i64, scratch_operands = 0 : i64, tpu.core_type = #tpu.core_type<tc>, window_params = [{transform_indices = @transform_0, window_bounds = array<i64: 2, 1024>}, {transform_indices = @transform_1, window_bounds = array<i64: 2, 1024>}]} {
    %c0 = arith.constant 0 : index
    %0 = memref.load %arg1[%c0] : memref<1xf32, #tpu.memory_space<smem>>
    %c0_0 = arith.constant 0 : index
    %c0_1 = arith.constant 0 : index
    %1 = vector.load %arg2[%c0_0, %c0_1] : memref<2x1024xf8E4M3FN, #tpu.memory_space<vmem>>, vector<2x1024xf8E4M3FN>
    %2 = arith.extf %1 : vector<2x1024xf8E4M3FN> to vector<2x1024xf32>
    %3 = vector.broadcast %0 : f32 to vector<2x1024xf32>
    %4 = arith.mulf %2, %3 : vector<2x1024xf32>
    %5 = arith.truncf %4 : vector<2x1024xf32> to vector<2x1024xbf16>
    %c0_2 = arith.constant 0 : index
    %c0_3 = arith.constant 0 : index
    %6 = vector.load %arg3[%c0_2, %c0_3] : memref<2x1024xbf16, #tpu.memory_space<vmem>>, vector<2x1024xbf16>
    tpu.vector_store %arg3[%c0_2, %c0_3], %5 {strides = array<i32>} : memref<2x1024xbf16, #tpu.memory_space<vmem>>, vector<2x1024xbf16>,
    return
  }
  func.func @transform_0(%arg0: i32, %arg1: memref<1xf32, #tpu.memory_space<smem>>) -> (i32, i32) {
    %c0_i32 = arith.constant 0 : i32
    %c0_i32_0 = arith.constant 0 : i32
    return %arg0, %c0_i32 : i32, i32
  }
  func.func @transform_1(%arg0: i32, %arg1: memref<1xf32, #tpu.memory_space<smem>>) -> (i32, i32) {
    %c0_i32 = arith.constant 0 : i32
    %c0_i32_0 = arith.constant 0 : i32
    return %arg0, %c0_i32 : i32, i32
  }
}

</mosaic_0001>

<llo_original>
// kernel: tpu_custom_call.1
$region0: #{tpu_custom_call.1}
  #allocation0 [shape = 'u32[]', space=smem, size = 0x4, offset = 0x4, fixed_abs, tag = 'smem constant byte address 0x4 - core index']
  #allocation1 [shape = 'u32[144,128]{1,0:T(1,128)}', space=vmem, size = 0x12000, scoped, tag = 'internal scratch']
  #allocation2 [shape = 's32[1]{0}', space=sflag, size = 0x4, scoped, tag = 'scoped memory for tpu_custom_call.1']
  #allocation3 [shape = 'f32[1]{0:T(128)S(6)}', space=smem, size = 0x200, scoped, tag = 'prefetched SMEM operand 0']
  %s0 = inlined_call_operand.<no memory space> [shape: f32[1], index: 0, kind: input, shape index: {}]
  %s1 = inlined_call_operand.hbm [shape: f8e4m3fn[2,1024], index: 1, kind: input, shape index: {}]
  %s2 = inlined_call_operand.hbm [shape: bf16[2,1024], index: 2, kind: output, shape index: {}]
  %s3 = sld [smem:[#allocation0]]
  $region22: #{tpu_custom_call.1} parent=0
    _
  %s5 = ssub.s32 1, %s3
  %s6 = scalar_select 0, %s5, %s3
  %7 = sst [smem:[#allocation3]] %s0
  $region1: #{tpu_custom_call.1} parent=0
    #allocation4 [shape = 'u8[4096]{0}', space=vmem, size = 0x1000, scoped, tag = 'input window, operand 1, single buffered']
    #allocation5 [shape = 's32[1]{0}', space=sflag, size = 0x4, scoped, tag = 'scoped memory for tpu_custom_call.1']
    #allocation6 [shape = 's32[1]{0}', space=sflag, size = 0x4, scoped, tag = 'scoped memory for tpu_custom_call.1']
    #allocation7 [shape = 'u8[4096]{0}', space=vmem, size = 0x1000, scoped, tag = 'output window, operand 0, single buffered']
    %8 = vsyncpa [#allocation5], 0
    %9 = vsyncpa [#allocation6], 0
    // Predicated region
    $region2: #{tpu_custom_call.1} parent=1 // pred_check
      _
    $region3: #{tpu_custom_call.1} parent=1 // pred_check_branch
      %11 = sbr.rel (0) target = $region5
    $region4: #{tpu_custom_call.1} parent=1 // pred_region
      %s13 = ssub.s32 128, 128
      %14 = vsyncadd [#allocation5], %s13
      %s16 = sshll.u32 [#allocation4], 4
      %s17 = int_to_ptr.vmem [resolvable:$true] %s16
      %19 = dma.hbm_to_vmem [thread:$0]  %s1, 128, %s17, [#allocation5]
    $region5: #{tpu_custom_call.1} parent=1 // pred_fallthru
      _
    // Predicated region
    $region6: #{tpu_custom_call.1} parent=1 // pred_check
      _
    $region7: #{tpu_custom_call.1} parent=1 // pred_check_branch
      %21 = sbr.rel (0) target = $region9
    $region8: #{tpu_custom_call.1} parent=1 // pred_region
      %22 = dma.done [#allocation5], 128
    $region9: #{tpu_custom_call.1} parent=1 // pred_fallthru
      _
    %s23 = sld [smem:[#allocation3]]
    %v24 = vld [vmem:[#allocation4] sm:$0xff]
    $region10: #{tpu_custom_call.1} parent=1
      #allocation8 [shape = 'u8[4096]{0}', space=vmem, size = 0x1000, scoped, tag = 'scoped memory for tpu_custom_call.1']
      %25 = vst [vmem:[#allocation8] sm:$0xff] %v24
      %v26 = vld [vmem:[#allocation8] sm:$0x3]
      %v27 = vunpack.c.0.f8e4m3b11 %v26
      %v28 = vunpack.c.1.f8e4m3b11 %v26
      %v29 = vunpack.c.2.f8e4m3b11 %v26
      %v30 = vunpack.c.3.f8e4m3b11 %v26
      %v31 = vand.u32 2147483647, %v27
      %vm32 = vcmp.gt.f32.partialorder %v31, 29.0
      %vm33 = vcmp.ne.f32.partialorder %v27, %v27
      %v34 = vmul.f32 %v27, 16.0
      %v35 = vsel %vm33, -0.0, %v34
      %v36 = vsel %vm32, nan, %v35
      %v37 = vand.u32 2147483647, %v28
      %vm38 = vcmp.gt.f32.partialorder %v37, 29.0
      %vm39 = vcmp.ne.f32.partialorder %v28, %v28
      %v40 = vmul.f32 %v28, 16.0
      %v41 = vsel %vm39, -0.0, %v40
      %v42 = vsel %vm38, nan, %v41
      %v43 = vand.u32 2147483647, %v29
      %vm44 = vcmp.gt.f32.partialorder %v43, 29.0
      %vm45 = vcmp.ne.f32.partialorder %v29, %v29
      %v46 = vmul.f32 %v29, 16.0
      %v47 = vsel %vm45, -0.0, %v46
      %v48 = vsel %vm44, nan, %v47
      %v49 = vand.u32 2147483647, %v30
      %vm50 = vcmp.gt.f32.partialorder %v49, 29.0
      %vm51 = vcmp.ne.f32.partialorder %v30, %v30
      %v52 = vmul.f32 %v30, 16.0
      %v53 = vsel %vm51, -0.0, %v52
      %v54 = vsel %vm50, nan, %v53
    $region11: #{tpu_custom_call.1} parent=1
      #allocation9 [shape = 'u8[4096]{0}', space=vmem, size = 0x1000, scoped, tag = 'scoped memory for tpu_custom_call.1']
      %55 = vst [vmem:[#allocation9] sm:$0xff] %v24
      %s56 = scalar_lea.vmem [#allocation9], 2
      %v57 = vld [vmem:[%s56] sm:$0x3]
      %v58 = vunpack.c.0.f8e4m3b11 %v57
      %v59 = vunpack.c.1.f8e4m3b11 %v57
      %v60 = vunpack.c.2.f8e4m3b11 %v57
      %v61 = vunpack.c.3.f8e4m3b11 %v57
      %v62 = vand.u32 2147483647, %v58
      %vm63 = vcmp.gt.f32.partialorder %v62, 29.0
      %vm64 = vcmp.ne.f32.partialorder %v58, %v58
      %v65 = vmul.f32 %v58, 16.0
      %v66 = vsel %vm64, -0.0, %v65
      %v67 = vsel %vm63, nan, %v66
      %v68 = vand.u32 2147483647, %v59
      %vm69 = vcmp.gt.f32.partialorder %v68, 29.0
      %vm70 = vcmp.ne.f32.partialorder %v59, %v59
      %v71 = vmul.f32 %v59, 16.0
      %v72 = vsel %vm70, -0.0, %v71
      %v73 = vsel %vm69, nan, %v72
      %v74 = vand.u32 2147483647, %v60
      %vm75 = vcmp.gt.f32.partialorder %v74, 29.0
      %vm76 = vcmp.ne.f32.partialorder %v60, %v60
      %v77 = vmul.f32 %v60, 16.0
      %v78 = vsel %vm76, -0.0, %v77
      %v79 = vsel %vm75, nan, %v78
      %v80 = vand.u32 2147483647, %v61
      %vm81 = vcmp.gt.f32.partialorder %v80, 29.0
      %vm82 = vcmp.ne.f32.partialorder %v61, %v61
      %v83 = vmul.f32 %v61, 16.0
      %v84 = vsel %vm82, -0.0, %v83
      %v85 = vsel %vm81, nan, %v84
    $region12: #{tpu_custom_call.1} parent=1
      #allocation10 [shape = 'u8[4096]{0}', space=vmem, size = 0x1000, scoped, tag = 'scoped memory for tpu_custom_call.1']
      %86 = vst [vmem:[#allocation10] sm:$0xff] %v24
      %s87 = scalar_lea.vmem [#allocation10], 4
      %v88 = vld [vmem:[%s87] sm:$0x3]
      %v89 = vunpack.c.0.f8e4m3b11 %v88
      %v90 = vunpack.c.1.f8e4m3b11 %v88
      %v91 = vunpack.c.2.f8e4m3b11 %v88
      %v92 = vunpack.c.3.f8e4m3b11 %v88
      %v93 = vand.u32 2147483647, %v89
      %vm94 = vcmp.gt.f32.partialorder %v93, 29.0
      %vm95 = vcmp.ne.f32.partialorder %v89, %v89
      %v96 = vmul.f32 %v89, 16.0
      %v97 = vsel %vm95, -0.0, %v96
      %v98 = vsel %vm94, nan, %v97
      %v99 = vand.u32 2147483647, %v90
      %vm100 = vcmp.gt.f32.partialorder %v99, 29.0
      %vm101 = vcmp.ne.f32.partialorder %v90, %v90
      %v102 = vmul.f32 %v90, 16.0
      %v103 = vsel %vm101, -0.0, %v102
      %v104 = vsel %vm100, nan, %v103
      %v105 = vand.u32 2147483647, %v91
      %vm106 = vcmp.gt.f32.partialorder %v105, 29.0
      %vm107 = vcmp.ne.f32.partialorder %v91, %v91
      %v108 = vmul.f32 %v91, 16.0
      %v109 = vsel %vm107, -0.0, %v108
      %v110 = vsel %vm106, nan, %v109
      %v111 = vand.u32 2147483647, %v92
      %vm112 = vcmp.gt.f32.partialorder %v111, 29.0
      %vm113 = vcmp.ne.f32.partialorder %v92, %v92
      %v114 = vmul.f32 %v92, 16.0
      %v115 = vsel %vm113, -0.0, %v114
      %v116 = vsel %vm112, nan, %v115
    $region13: #{tpu_custom_call.1} parent=1
      #allocation11 [shape = 'u8[4096]{0}', space=vmem, size = 0x1000, scoped, tag = 'scoped memory for tpu_custom_call.1']
      %117 = vst [vmem:[#allocation11] sm:$0xff] %v24
      %s118 = scalar_lea.vmem [#allocation11], 6
      %v119 = vld [vmem:[%s118] sm:$0x3]
      %v120 = vunpack.c.0.f8e4m3b11 %v119
      %v121 = vunpack.c.1.f8e4m3b11 %v119
      %v122 = vunpack.c.2.f8e4m3b11 %v119
      %v123 = vunpack.c.3.f8e4m3b11 %v119
      %v124 = vand.u32 2147483647, %v120
      %vm125 = vcmp.gt.f32.partialorder %v124, 29.0
      %vm126 = vcmp.ne.f32.partialorder %v120, %v120
      %v127 = vmul.f32 %v120, 16.0
      %v128 = vsel %vm126, -0.0, %v127
      %v129 = vsel %vm125, nan, %v128
      %v130 = vand.u32 2147483647, %v121
      %vm131 = vcmp.gt.f32.partialorder %v130, 29.0
      %vm132 = vcmp.ne.f32.partialorder %v121, %v121
      %v133 = vmul.f32 %v121, 16.0
      %v134 = vsel %vm132, -0.0, %v133
      %v135 = vsel %vm131, nan, %v134
      %v136 = vand.u32 2147483647, %v122
      %vm137 = vcmp.gt.f32.partialorder %v136, 29.0
      %vm138 = vcmp.ne.f32.partialorder %v122, %v122
      %v139 = vmul.f32 %v122, 16.0
      %v140 = vsel %vm138, -0.0, %v139
      %v141 = vsel %vm137, nan, %v140
      %v142 = vand.u32 2147483647, %v123
      %vm143 = vcmp.gt.f32.partialorder %v142, 29.0
      %vm144 = vcmp.ne.f32.partialorder %v123, %v123
      %v145 = vmul.f32 %v123, 16.0
      %v146 = vsel %vm144, -0.0, %v145
      %v147 = vsel %vm143, nan, %v146
    %v148 = vstv %s23
    %v149 = vmul.f32 %v36, %v148
    %v150 = vmul.f32 %v67, %v148
    %v151 = vmul.f32 %v98, %v148
    %v152 = vmul.f32 %v129, %v148
    %v157 = vcombine.high %v149, %v149
    %v158 = vcombine.high %v150, %v150
    %v159 = vcombine.high %v151, %v151
    %v160 = vcombine.high %v152, %v152
    %v165 = vpack.c.bf16 %v149, %v149
    %v166 = vpack.c.bf16 %v157, %v157
    %v167 = vpack.c.bf16 %v150, %v150
    %v168 = vpack.c.bf16 %v158, %v158
    %v169 = vpack.c.bf16 %v151, %v151
    %v170 = vpack.c.bf16 %v159, %v159
    %v171 = vpack.c.bf16 %v152, %v152
    %v172 = vpack.c.bf16 %v160, %v160
    %v181 = vcombine.low %v165, %v166
    %v182 = vcombine.low %v167, %v168
    %v183 = vcombine.low %v169, %v170
    %v184 = vcombine.low %v171, %v172
    %v186 = vunpack.c.l.s4 1966171168
    %v187 = vunpack.c.0.s8 %v186
    %v188 = vlaneseq
    %v189 = vshrl.u32 %v188, 7
    %v190 = vsub.s32 %v187, %v189
    %v191 = vrot.slane %v181, %v190
    %v193 = vunpack.c.l.s4 1966171168
    %v194 = vunpack.c.0.s8 %v193
    %v195 = vlaneseq
    %v196 = vshrl.u32 %v195, 7
    %v197 = vsub.s32 %v194, %v196
    %v198 = vrot.slane %v182, %v197
    %v200 = vunpack.c.l.s4 1966171168
    %v201 = vunpack.c.0.s8 %v200
    %v202 = vlaneseq
    %v203 = vshrl.u32 %v202, 7
    %v204 = vsub.s32 %v201, %v203
    %v205 = vrot.slane %v183, %v204
    %v207 = vunpack.c.l.s4 1966171168
    %v208 = vunpack.c.0.s8 %v207
    %v209 = vlaneseq
    %v210 = vshrl.u32 %v209, 7
    %v211 = vsub.s32 %v208, %v210
    %v212 = vrot.slane %v184, %v211
    %v213 = vcombine.low %v191, %v198
    %v214 = vcombine.low %v205, %v212
    %v216 = vunpack.c.l.s4 1966171168
    %v217 = vunpack.c.0.s8 %v216
    %v218 = vlaneseq
    %v219 = vshrl.u32 %v218, 7
    %v220 = vsub.s32 %v217, %v219
    %v221 = vrot.slane %v213, %v220
    %v223 = vunpack.c.l.s4 1966171168
    %v224 = vunpack.c.0.s8 %v223
    %v225 = vlaneseq
    %v226 = vshrl.u32 %v225, 7
    %v227 = vsub.s32 %v224, %v226
    %v228 = vrot.slane %v214, %v227
    %v229 = vcombine.low %v221, %v228
    %231 = vst [vmem:[#allocation7] sm:$0xff] %v229
    // Predicated region
    $region14: #{tpu_custom_call.1} parent=1 // pred_check
      _
    $region15: #{tpu_custom_call.1} parent=1 // pred_check_branch
      %233 = sbr.rel (0) target = $region17
    $region16: #{tpu_custom_call.1} parent=1 // pred_region
      %s235 = ssub.s32 128, 128
      %236 = vsyncadd [#allocation6], %s235
      %s238 = sshll.u32 [#allocation7], 4
      %s239 = int_to_ptr.vmem [resolvable:$true] %s238
      %241 = dma.vmem_to_hbm [thread:$0]  %s239, 128, %s2, [#allocation6]
    $region17: #{tpu_custom_call.1} parent=1 // pred_fallthru
      _
    // Predicated region
    $region18: #{tpu_custom_call.1} parent=1 // pred_check
      _
    $region19: #{tpu_custom_call.1} parent=1 // pred_check_branch
      %243 = sbr.rel (0) target = $region21
    $region20: #{tpu_custom_call.1} parent=1 // pred_region
      %244 = dma.done [#allocation6], 128
    $region21: #{tpu_custom_call.1} parent=1 // pred_fallthru
      _
    %245 = vsyncpa [#allocation5], 1
    %246 = vsyncpa [#allocation6], 1

</llo_original>
